<compile_context>
chip_gen: v5e
topology: v5e:2x2
jax: 0.10.0
libtpu: 0.0.40
codegen_flags: <defaults>
</compile_context>

<pallas_src>
import jax
import jax.numpy as jnp
from jax import lax
from jax.experimental import pallas as pl
from jax.experimental.pallas import tpu as pltpu

HIDDEN = 512  # matches nn.Linear(num_agents*obs_dim, 512)


def _round_up(x, m):
    return (x + m - 1) // m * m


def _vmem_capacity_bytes():
    """Generation-aware VMEM capacity (64 MiB/TC on v7x, 128 MiB on v5e/v6e)."""
    try:
        info = pltpu.get_tpu_info()
        cap = getattr(info, "vmem_capacity_bytes", None)
        if cap:
            return int(cap)
    except Exception:
        pass
    return 64 * 1024 * 1024  # conservative fallback (v7x per-TensorCore)


def _select_tiles(B, D, w1_itemsize, vmem_budget, block_b, block_k):
    """Pick (tb, tk, num_k).  Prefers a fully-resident w1 (num_k == 1)."""
    # --- batch tile: >= 2 tiles whenever B > 128 (feeds both TCs on v7x) ----
    if B > 128:
        tb = min(block_b, _round_up(pl.cdiv(B, 2), 128))
    else:
        tb = B  # single exact tile; block dims equal the full array dims

    # Testing / override hook: force a K split.
    if block_k is not None and block_k < D:
        tk = _round_up(block_k, 128)
        num_k = pl.cdiv(D, tk)
        return tb, tk, num_k

    fixed = 2 * tb * HIDDEN * 4 + 4 * tb * 4 + 4 * HIDDEN * 4 + (2 << 20)
    resident = D * HIDDEN * w1_itemsize + 2 * tb * D * 4 + fixed
    if resident <= vmem_budget:
        return tb, D, 1  # w1 fully resident, single-buffered, no accumulator

    # K must be split: w1 gets re-streamed once per batch tile, so amortize it
    # with a bigger batch tile when the batch is large enough.
    if B >= 4 * block_b:
        tb = min(2 * block_b, _round_up(pl.cdiv(B, 2), 128))
        fixed = 2 * tb * HIDDEN * 4 + 4 * tb * 4 + 4 * HIDDEN * 4 + (2 << 20)
    per_col = 2 * tb * 4 + 2 * HIDDEN * w1_itemsize  # x + w1 double-buffers
    tk_max = max(128, (vmem_budget - fixed) // per_col // 128 * 128)
    tk_max = min(tk_max, _round_up(D, 128))
    num_k = pl.cdiv(D, tk_max)
    tk = _round_up(pl.cdiv(D, num_k), 128)   # minimize padding (< 128 cols)
    num_k = pl.cdiv(D, tk)
    return tb, tk, num_k


def _make_kernel(num_k, d_total, tk, mask_k, compute_dtype):
    """Two-layer critic on one (batch tile i, feature tile k) grid step."""

    def kernel(x_ref, w1_ref, b1_ref, w2_ref, b2_ref, o_ref, *scratch):
        k = pl.program_id(1)

        x = x_ref[...]
        if mask_k:
            # Last K tile is partial: zero the out-of-range columns (the matching
            # w1 rows are zero-padded wrapper-side, so the pad region adds 0).
            col = lax.broadcasted_iota(jnp.int32, (1, tk), 1)
            x = jnp.where(col < (d_total - k * tk), x, 0.0)
        if compute_dtype is not None:
            # In-kernel activation cast (VPU work hidden under the MXU matmul).
            x = x.astype(compute_dtype)

        # Layer 1 partial matmul on the MXU, f32 accumulation.
        p = jnp.dot(x, w1_ref[...], preferred_element_type=jnp.float32)

        def finalize(acc):
            h = jnp.maximum(acc + b1_ref[...], 0.0)               # bias + ReLU
            # Layer 2 as a lane reduction (VPU/XLU) instead of an N=1 MXU matmul.
            v = jnp.sum(h * w2_ref[...], axis=-1) + b2_ref[0, 0]  # (TB,)
            o_ref[...] = v.reshape(1, -1)                         # lane-dense (1, TB)

        if num_k == 1:
            finalize(p)  # no accumulator round-trip at all
        else:
            acc_ref = scratch[0]

            @pl.when(k == 0)
            def _():
                acc_ref[...] = p           # direct write (no zero-init + re-read)

            @pl.when(k > 0)
            def _():
                acc_ref[...] += p

            @pl.when(k == num_k - 1)
            def _():
                finalize(acc_ref[...])

    return kernel


def centralized_critic(states, w1, b1, w2, b2, *, compute_dtype=jnp.bfloat16,
                       block_b=512, block_k=None, vmem_budget_bytes=None):
    """Centralized critic forward: ReLU(states @ w1 + b1) @ w2.T + b2.

    states: (B, D) with D = num_agents * obs_dim (stays in native dtype in HBM)
    w1: (D, 512), b1: (1, 512), w2: (1, 512) (row vector), b2: (1, 1)
    Returns (B, 1) float32.
    """
    B, D = states.shape
    assert w1.shape == (D, HIDDEN)
    assert b1.shape == (1, HIDDEN)
    assert w2.shape == (1, HIDDEN)
    assert b2.shape == (1, 1)

    # One-time weight-side prep (outside the hot activation path).
    if compute_dtype is not None:
        w1 = w1.astype(compute_dtype)
    b1 = b1.astype(jnp.float32)
    w2 = w2.astype(jnp.float32)
    b2 = b2.astype(jnp.float32)

    cap = _vmem_capacity_bytes()
    budget = vmem_budget_bytes if vmem_budget_bytes is not None else int(cap * 0.7)
    tb, tk, num_k = _select_tiles(B, D, jnp.dtype(w1.dtype).itemsize, budget,
                                  block_b, block_k)
    num_b = pl.cdiv(B, tb)
    d_pad = num_k * tk
    mask_k = d_pad != D
    if d_pad != D:
        # One-time zero pad of the weight rows only (cheap, weight-side); the
        # kernel masks the matching columns of the states tile.
        w1 = jnp.pad(w1, ((0, d_pad - D), (0, 0)))

    if num_k == 1:
        # Resident (constant-index) weight only needs a single VMEM buffer.
        w1_spec = pl.BlockSpec((tk, HIDDEN), lambda i, k: (0, 0),
                               pipeline_mode=pl.Buffered(1))
        scratch = []
    else:
        w1_spec = pl.BlockSpec((tk, HIDDEN), lambda i, k: (k, 0))
        scratch = [pltpu.VMEM((tb, HIDDEN), jnp.float32)]

    kernel = _make_kernel(num_k, D, tk, mask_k, compute_dtype)

    out = pl.pallas_call(
        kernel,
        out_shape=jax.ShapeDtypeStruct((1, B), jnp.float32),      # lane-dense
        grid_spec=pltpu.PrefetchScalarGridSpec(
            num_scalar_prefetch=0,
            grid=(num_b, num_k),                                  # reduction last
            in_specs=[
                pl.BlockSpec((tb, tk), lambda i, k: (i, k)),      # states tile
                w1_spec,                                          # w1
                pl.BlockSpec((1, HIDDEN), lambda i, k: (0, 0),
                             pipeline_mode=pl.Buffered(1)),       # b1 (resident)
                pl.BlockSpec((1, HIDDEN), lambda i, k: (0, 0),
                             pipeline_mode=pl.Buffered(1)),       # w2 row (resident)
                pl.BlockSpec(memory_space=pltpu.MemorySpace.SMEM),  # b2 scalar
            ],
            out_specs=pl.BlockSpec((1, tb), lambda i, k: (0, i)),
            scratch_shapes=scratch,
        ),
        compiler_params=pltpu.CompilerParams(
            dimension_semantics=("parallel", "arbitrary"),
            vmem_limit_bytes=int(min(cap, max(budget + (8 << 20), 32 << 20))),
        ),
    )(states, w1, b1, w2, b2)

    # Undo the lane-dense layout: (1, B) -> (B, 1).
    return out.reshape(B, 1)


def init_params(key, num_agents, obs_dim):
    """Deterministic init mimicking PyTorch nn.Linear default U(-1/sqrt(fan_in), ...)."""
    D = num_agents * obs_dim
    k1, k2, k3, k4 = jax.random.split(key, 4)
    bound1 = 1.0 / jnp.sqrt(jnp.float32(D))
    bound2 = 1.0 / jnp.sqrt(jnp.float32(HIDDEN))
    w1 = jax.random.uniform(k1, (D, HIDDEN), jnp.float32, -bound1, bound1)
    b1 = jax.random.uniform(k2, (1, HIDDEN), jnp.float32, -bound1, bound1)
    w2 = jax.random.uniform(k3, (1, HIDDEN), jnp.float32, -bound2, bound2)  # row of (512,1)
    b2 = jax.random.uniform(k4, (1, 1), jnp.float32, -bound2, bound2)
    return w1, b1, w2, b2


if __name__ == "__main__":
    key = jax.random.PRNGKey(0)

    def run_case(num_agents, obs_dim, batch, compute_dtype, block_k, tol):
        D = num_agents * obs_dim
        kp, ks = jax.random.split(jax.random.fold_in(key, D * 131 + batch))
        w1, b1, w2, b2 = init_params(kp, num_agents, obs_dim)
        states = jax.random.normal(ks, (batch, D), jnp.float32)
        out = centralized_critic(states, w1, b1, w2, b2,
                                 compute_dtype=compute_dtype, block_k=block_k)
        out = jax.block_until_ready(out)
        ref = jnp.maximum(states @ w1 + b1, 0.0) @ w2.T + b2   # pure-JAX reference
        assert out.shape == (batch, 1), out.shape
        assert bool(jnp.all(jnp.isfinite(out)))
        err = float(jnp.max(jnp.abs(out - ref)))
        assert err < tol, (num_agents, obs_dim, batch, str(compute_dtype), err)

    # f32 path, single K tile, single (exact) batch tile.
    run_case(4, 8, 64, None, None, 1e-4)
    # bf16 default path (bf16 w1 in HBM, in-kernel activation cast, f32 accumulate).
    run_case(4, 8, 64, jnp.bfloat16, None, 3e-2)
    # Multiple batch tiles with a partial last tile (no wrapper-side padding).
    run_case(4, 8, 200, jnp.bfloat16, None, 3e-2)
    # Forced split-K with a partial last K tile (accumulator + in-kernel K mask).
    run_case(3, 100, 96, None, 128, 1e-4)

    print("KERNEL_OK")
</pallas_src>

<mosaic_0001>
module attributes {stable_mosaic.version = 11 : i64} {
  func.func @kernel(%arg0: i32, %arg1: i32, %arg2: memref<64x32xf32, #tpu.memory_space<vmem>>, %arg3: memref<32x512xf32, #tpu.memory_space<vmem>>, %arg4: memref<1x512xf32, #tpu.memory_space<vmem>>, %arg5: memref<1x512xf32, #tpu.memory_space<vmem>>, %arg6: memref<1x1xf32, #tpu.memory_space<smem>>, %arg7: memref<1x64xf32, #tpu.memory_space<vmem>>) attributes {dimension_semantics = [#tpu.dimension_semantics<parallel>, #tpu.dimension_semantics<arbitrary>], iteration_bounds = array<i64: 1, 1>, scalar_prefetch = 0 : i64, scratch_operands = 0 : i64, tpu.core_type = #tpu.core_type<tc>, window_params = [{transform_indices = @transform_0, window_bounds = array<i64: 64, 32>}, {pipeline_mode = #tpu.pipeline_mode<synchronous>, transform_indices = @transform_1, window_bounds = array<i64: 32, 512>}, {pipeline_mode = #tpu.pipeline_mode<synchronous>, transform_indices = @transform_2, window_bounds = array<i64: 1, 512>}, {pipeline_mode = #tpu.pipeline_mode<synchronous>, transform_indices = @transform_3, window_bounds = array<i64: 1, 512>}, {transform_indices = @transform_4, window_bounds = array<i64: 1, 1>}, {transform_indices = @transform_5, window_bounds = array<i64: 1, 64>}]} {
    %c0 = arith.constant 0 : index
    %c0_0 = arith.constant 0 : index
    %0 = vector.load %arg2[%c0, %c0_0] : memref<64x32xf32, #tpu.memory_space<vmem>>, vector<64x32xf32>
    %c0_1 = arith.constant 0 : index
    %c0_2 = arith.constant 0 : index
    %1 = vector.load %arg3[%c0_1, %c0_2] : memref<32x512xf32, #tpu.memory_space<vmem>>, vector<32x512xf32>
    %cst = arith.constant dense<0.000000e+00> : vector<64x512xf32>
    %2 = tpu.matmul %0, %1, %cst {dimension_numbers = #tpu.dot_dimension_numbers<[1], [0], [0], [1], [0, 0, 1, 1], [], []>} : vector<64x32xf32>, vector<32x512xf32>, vector<64x512xf32> -> vector<64x512xf32>
    %c0_3 = arith.constant 0 : index
    %c0_4 = arith.constant 0 : index
    %3 = vector.load %arg4[%c0_3, %c0_4] : memref<1x512xf32, #tpu.memory_space<vmem>>, vector<1x512xf32>
    %4 = vector.broadcast %3 : vector<1x512xf32> to vector<64x512xf32>
    %5 = arith.addf %2, %4 : vector<64x512xf32>
    %cst_5 = arith.constant 0.000000e+00 : f32
    %6 = vector.broadcast %cst_5 : f32 to vector<64x512xf32>
    %7 = arith.maximumf %5, %6 : vector<64x512xf32>
    %c0_6 = arith.constant 0 : index
    %c0_7 = arith.constant 0 : index
    %8 = vector.load %arg5[%c0_6, %c0_7] : memref<1x512xf32, #tpu.memory_space<vmem>>, vector<1x512xf32>
    %9 = vector.broadcast %8 : vector<1x512xf32> to vector<64x512xf32>
    %10 = arith.mulf %7, %9 : vector<64x512xf32>
    %cst_8 = arith.constant dense<0.000000e+00> : vector<64xf32>
    %11 = vector.multi_reduction <add>, %10, %cst_8 [1] : vector<64x512xf32> to vector<64xf32>
    %c0_9 = arith.constant 0 : index
    %c0_10 = arith.constant 0 : index
    %12 = memref.load %arg6[%c0_9, %c0_10] : memref<1x1xf32, #tpu.memory_space<smem>>
    %13 = vector.broadcast %12 : f32 to vector<64xf32>
    %14 = arith.addf %11, %13 : vector<64xf32>
    %15 = vector.shape_cast %14 : vector<64xf32> to vector<1x64xf32>
    %c0_11 = arith.constant 0 : index
    %c0_12 = arith.constant 0 : index
    %16 = vector.load %arg7[%c0_11, %c0_12] : memref<1x64xf32, #tpu.memory_space<vmem>>, vector<1x64xf32>
    tpu.vector_store %arg7[%c0_11, %c0_12], %15 {strides = array<i32>} : memref<1x64xf32, #tpu.memory_space<vmem>>, vector<1x64xf32>,
    return
  }
  func.func @transform_0(%arg0: i32, %arg1: i32) -> (i32, i32) {
    %c0_i32 = arith.constant 0 : i32
    return %arg0, %arg1 : i32, i32
  }
  func.func @transform_1(%arg0: i32, %arg1: i32) -> (i32, i32) {
    %c0_i32 = arith.constant 0 : i32
    %c0_i32_0 = arith.constant 0 : i32
    %c0_i32_1 = arith.constant 0 : i32
    return %c0_i32, %c0_i32_0 : i32, i32
  }
  func.func @transform_2(%arg0: i32, %arg1: i32) -> (i32, i32) {
    %c0_i32 = arith.constant 0 : i32
    %c0_i32_0 = arith.constant 0 : i32
    %c0_i32_1 = arith.constant 0 : i32
    return %c0_i32, %c0_i32_0 : i32, i32
  }
  func.func @transform_3(%arg0: i32, %arg1: i32) -> (i32, i32) {
    %c0_i32 = arith.constant 0 : i32
    %c0_i32_0 = arith.constant 0 : i32
    %c0_i32_1 = arith.constant 0 : i32
    return %c0_i32, %c0_i32_0 : i32, i32
  }
  func.func @transform_4(%arg0: i32, %arg1: i32) -> (i32, i32) {
    %c0_i32 = arith.constant 0 : i32
    %c0_i32_0 = arith.constant 0 : i32
    %c0_i32_1 = arith.constant 0 : i32
    return %c0_i32, %c0_i32_0 : i32, i32
  }
  func.func @transform_5(%arg0: i32, %arg1: i32) -> (i32, i32) {
    %c0_i32 = arith.constant 0 : i32
    %c0_i32_0 = arith.constant 0 : i32
    return %c0_i32, %arg0 : i32, i32
  }
}

</mosaic_0001>

<llo_original>
// kernel: tpu_custom_call.1
$region0: #{tpu_custom_call.1}
  #allocation0 [shape = 'u32[]', space=smem, size = 0x4, offset = 0x4, fixed_abs, tag = 'smem constant byte address 0x4 - core index']
  #allocation1 [shape = 'u32[72,128]{1,0:T(1,128)}', space=vmem, size = 0x9000, scoped, tag = 'internal scratch']
  #allocation2 [shape = 'f32[1,1]{1,0:T(1,128)S(6)}', space=smem, size = 0x200, scoped, tag = 'scoped memory for tpu_custom_call.1']
  %s0 = inlined_call_operand.vmem [shape: f32[64,32], index: 0, kind: input, shape index: {}]
  %s1 = inlined_call_operand.hbm [shape: f32[32,512], index: 1, kind: input, shape index: {}]
  %s2 = inlined_call_operand.vmem [shape: f32[1,512], index: 2, kind: input, shape index: {}]
  %s3 = inlined_call_operand.vmem [shape: f32[1,512], index: 3, kind: input, shape index: {}]
  %s4 = inlined_call_operand.<no memory space> [shape: f32[1,1], index: 4, kind: input, shape index: {}]
  %s5 = inlined_call_operand.hbm [shape: f32[1,64], index: 5, kind: output, shape index: {}]
  %s6 = sld [smem:[#allocation0]]
  $region34: #{tpu_custom_call.1} parent=0
    _
  %s8 = ssub.s32 1, %s6
  %s9 = scalar_select 0, %s8, %s6
  %10 = sst [smem:[#allocation2]] %s4
  $region1: #{tpu_custom_call.1} parent=0
    #allocation3 [shape = 'u8[65536]{0}', space=vmem, size = 0x10000, scoped, tag = 'input window, operand 1, single buffered']
    #allocation4 [shape = 's32[1]{0}', space=sflag, size = 0x4, scoped, tag = 'scoped memory for tpu_custom_call.1']
    #allocation5 [shape = 's32[1]{0}', space=sflag, size = 0x4, scoped, tag = 'scoped memory for tpu_custom_call.1']
    #allocation6 [shape = 'u8[512]{0}', space=vmem, size = 0x400, scoped, tag = 'output window, operand 0, single buffered']
    %11 = vsyncpa [#allocation4], 0
    %12 = vsyncpa [#allocation5], 0
    // Predicated region
    $region2: #{tpu_custom_call.1} parent=1 // pred_check
      _
    $region3: #{tpu_custom_call.1} parent=1 // pred_check_branch
      %14 = sbr.rel (0) target = $region5
    $region4: #{tpu_custom_call.1} parent=1 // pred_region
      _
    $region5: #{tpu_custom_call.1} parent=1 // pred_fallthru
      _
    // Predicated region
    $region6: #{tpu_custom_call.1} parent=1 // pred_check
      _
    $region7: #{tpu_custom_call.1} parent=1 // pred_check_branch
      %16 = sbr.rel (0) target = $region9
    $region8: #{tpu_custom_call.1} parent=1 // pred_region
      %18 = vsyncadd [#allocation4], 0
      %s19 = sshll.u32 %s1, 4
      %s20 = int_to_ptr.hbm [resolvable:$true] %s19
      %s21 = sshll.u32 [#allocation3], 4
      %s22 = int_to_ptr.vmem [resolvable:$true] %s21
      %27 = dma.hbm_to_vmem [thread:$0]  %s20, 2048, %s22, [#allocation4], 512, 512, 32
    $region9: #{tpu_custom_call.1} parent=1 // pred_fallthru
      _
    // Predicated region
    $region10: #{tpu_custom_call.1} parent=1 // pred_check
      _
    $region11: #{tpu_custom_call.1} parent=1 // pred_check_branch
      %29 = sbr.rel (0) target = $region13
    $region12: #{tpu_custom_call.1} parent=1 // pred_region
      _
    $region13: #{tpu_custom_call.1} parent=1 // pred_fallthru
      _
    // Predicated region
    $region14: #{tpu_custom_call.1} parent=1 // pred_check
      _
    $region15: #{tpu_custom_call.1} parent=1 // pred_check_branch
      %31 = sbr.rel (0) target = $region17
    $region16: #{tpu_custom_call.1} parent=1 // pred_region
      _
    $region17: #{tpu_custom_call.1} parent=1 // pred_fallthru
      _
    // Predicated region
    $region18: #{tpu_custom_call.1} parent=1 // pred_check
      _
    $region19: #{tpu_custom_call.1} parent=1 // pred_check_branch
      %33 = sbr.rel (0) target = $region21
    $region20: #{tpu_custom_call.1} parent=1 // pred_region
      _
    $region21: #{tpu_custom_call.1} parent=1 // pred_fallthru
      _
    // Predicated region
    $region22: #{tpu_custom_call.1} parent=1 // pred_check
      _
    $region23: #{tpu_custom_call.1} parent=1 // pred_check_branch
      %35 = sbr.rel (0) target = $region25
    $region24: #{tpu_custom_call.1} parent=1 // pred_region
      %37 = dma.done [#allocation4], 2048
    $region25: #{tpu_custom_call.1} parent=1 // pred_fallthru
      _
    %v38 = vld [vmem:[%s0] sm:$0xff]
    %v39 = vld [vmem:[%s0 + $0x8] sm:$0xff]
    %v40 = vld [vmem:[%s0 + $0x10] sm:$0xff]
    %v41 = vld [vmem:[%s0 + $0x18] sm:$0xff]
    %v42 = vld [vmem:[%s0 + $0x20] sm:$0xff]
    %v43 = vld [vmem:[%s0 + $0x28] sm:$0xff]
    %v44 = vld [vmem:[%s0 + $0x30] sm:$0xff]
    %v45 = vld [vmem:[%s0 + $0x38] sm:$0xff]
    %v46 = vld [vmem:[#allocation3] sm:$0xff]
    %v47 = vld [vmem:[#allocation3 + $0x8] sm:$0xff]
    %v48 = vld [vmem:[#allocation3 + $0x10] sm:$0xff]
    %v49 = vld [vmem:[#allocation3 + $0x18] sm:$0xff]
    %v50 = vld [vmem:[#allocation3 + $0x20] sm:$0xff]
    %v51 = vld [vmem:[#allocation3 + $0x28] sm:$0xff]
    %v52 = vld [vmem:[#allocation3 + $0x30] sm:$0xff]
    %v53 = vld [vmem:[#allocation3 + $0x38] sm:$0xff]
    %v54 = vld [vmem:[#allocation3 + $0x40] sm:$0xff]
    %v55 = vld [vmem:[#allocation3 + $0x48] sm:$0xff]
    %v56 = vld [vmem:[#allocation3 + $0x50] sm:$0xff]
    %v57 = vld [vmem:[#allocation3 + $0x58] sm:$0xff]
    %v58 = vld [vmem:[#allocation3 + $0x60] sm:$0xff]
    %v59 = vld [vmem:[#allocation3 + $0x68] sm:$0xff]
    %v60 = vld [vmem:[#allocation3 + $0x70] sm:$0xff]
    %v61 = vld [vmem:[#allocation3 + $0x78] sm:$0xff]
    %v62 = vld [vmem:[%s2] sm:$0xf]
    %v64 = vperm.slane %v62, 0
    %v65 = vperm.slane %v62, 1
    %v66 = vperm.slane %v62, 2
    %v67 = vperm.slane %v62, 3
    %vm72 = vcmask 261120
    %v74 = vsel %vm72, %v38, 0
    %v77 = vsel %vm72, %v39, 0
    %v80 = vsel %vm72, %v40, 0
    %v83 = vsel %vm72, %v41, 0
    %v86 = vsel %vm72, %v42, 0
    %v89 = vsel %vm72, %v43, 0
    %v92 = vsel %vm72, %v44, 0
    %v95 = vsel %vm72, %v45, 0
    %97 = vmatpush.msra.mxu0 0.0
    %98 = vmatpush.msra.mxu0 0.0
    %99 = vmatpush.msra.mxu0 0.0
    %100 = vmatpush.msra.mxu0 0.0
    %101 = vmatpush.msra.mxu0 0.0
    %102 = vmatpush.msra.mxu0 0.0
    %103 = vmatpush.msra.mxu0 0.0
    %104 = vmatpush.msra.mxu0 0.0
    %105 = vmatpush.msra.mxu0 0.0
    %106 = vmatpush.msra.mxu0 0.0
    %107 = vmatpush.msra.mxu0 0.0
    %108 = vmatpush.msra.mxu0 0.0
    %109 = vmatpush.msra.mxu0 %v58
    %110 = vmatpush.msra.mxu0 %v54
    %111 = vmatpush.msra.mxu0 %v50
    %112 = vmatpush.msra.mxu0 %v46
    %113 = vmatmul.f32.gmra.mxu0 %v74
    %v114 = vpop.f32.mrf.mxu0
    %v115 = vadd.f32 %v64, %v114
    %116 = vmatmul.f32.gmra.mxu0 %v77
    %v117 = vpop.f32.mrf.mxu0
    %v118 = vadd.f32 %v64, %v117
    %119 = vmatmul.f32.gmra.mxu0 %v80
    %v120 = vpop.f32.mrf.mxu0
    %v121 = vadd.f32 %v64, %v120
    %122 = vmatmul.f32.gmra.mxu0 %v83
    %v123 = vpop.f32.mrf.mxu0
    %v124 = vadd.f32 %v64, %v123
    %125 = vmatmul.f32.gmra.mxu0 %v86
    %v126 = vpop.f32.mrf.mxu0
    %v127 = vadd.f32 %v64, %v126
    %128 = vmatmul.f32.gmra.mxu0 %v89
    %v129 = vpop.f32.mrf.mxu0
    %v130 = vadd.f32 %v64, %v129
    %131 = vmatmul.f32.gmra.mxu0 %v92
    %v132 = vpop.f32.mrf.mxu0
    %v133 = vadd.f32 %v64, %v132
    %134 = vmatmul.f32.gmra.mxu0 %v95
    %v135 = vpop.f32.mrf.mxu0
    %v136 = vadd.f32 %v64, %v135
    %137 = vdwg.mxu0
    %138 = vmatpush.msra.mxu0 0.0
    %139 = vmatpush.msra.mxu0 0.0
    %140 = vmatpush.msra.mxu0 0.0
    %141 = vmatpush.msra.mxu0 0.0
    %142 = vmatpush.msra.mxu0 0.0
    %143 = vmatpush.msra.mxu0 0.0
    %144 = vmatpush.msra.mxu0 0.0
    %145 = vmatpush.msra.mxu0 0.0
    %146 = vmatpush.msra.mxu0 0.0
    %147 = vmatpush.msra.mxu0 0.0
    %148 = vmatpush.msra.mxu0 0.0
    %149 = vmatpush.msra.mxu0 0.0
    %150 = vmatpush.msra.mxu0 %v59
    %151 = vmatpush.msra.mxu0 %v55
    %152 = vmatpush.msra.mxu0 %v51
    %153 = vmatpush.msra.mxu0 %v47
    %154 = vmatmul.f32.gmra.mxu0 %v74
    %v155 = vpop.f32.mrf.mxu0
    %v156 = vadd.f32 %v65, %v155
    %157 = vmatmul.f32.gmra.mxu0 %v77
    %v158 = vpop.f32.mrf.mxu0
    %v159 = vadd.f32 %v65, %v158
    %160 = vmatmul.f32.gmra.mxu0 %v80
    %v161 = vpop.f32.mrf.mxu0
    %v162 = vadd.f32 %v65, %v161
    %163 = vmatmul.f32.gmra.mxu0 %v83
    %v164 = vpop.f32.mrf.mxu0
    %v165 = vadd.f32 %v65, %v164
    %166 = vmatmul.f32.gmra.mxu0 %v86
    %v167 = vpop.f32.mrf.mxu0
    %v168 = vadd.f32 %v65, %v167
    %169 = vmatmul.f32.gmra.mxu0 %v89
    %v170 = vpop.f32.mrf.mxu0
    %v171 = vadd.f32 %v65, %v170
    %172 = vmatmul.f32.gmra.mxu0 %v92
    %v173 = vpop.f32.mrf.mxu0
    %v174 = vadd.f32 %v65, %v173
    %175 = vmatmul.f32.gmra.mxu0 %v95
    %v176 = vpop.f32.mrf.mxu0
    %v177 = vadd.f32 %v65, %v176
    %178 = vdwg.mxu0
    %179 = vmatpush.msra.mxu0 0.0
    %180 = vmatpush.msra.mxu0 0.0
    %181 = vmatpush.msra.mxu0 0.0
    %182 = vmatpush.msra.mxu0 0.0
    %183 = vmatpush.msra.mxu0 0.0
    %184 = vmatpush.msra.mxu0 0.0
    %185 = vmatpush.msra.mxu0 0.0
    %186 = vmatpush.msra.mxu0 0.0
    %187 = vmatpush.msra.mxu0 0.0
    %188 = vmatpush.msra.mxu0 0.0
    %189 = vmatpush.msra.mxu0 0.0
    %190 = vmatpush.msra.mxu0 0.0
    %191 = vmatpush.msra.mxu0 %v60
    %192 = vmatpush.msra.mxu0 %v56
    %193 = vmatpush.msra.mxu0 %v52
    %194 = vmatpush.msra.mxu0 %v48
    %195 = vmatmul.f32.gmra.mxu0 %v74
    %v196 = vpop.f32.mrf.mxu0
    %v197 = vadd.f32 %v66, %v196
    %198 = vmatmul.f32.gmra.mxu0 %v77
    %v199 = vpop.f32.mrf.mxu0
    %v200 = vadd.f32 %v66, %v199
    %201 = vmatmul.f32.gmra.mxu0 %v80
    %v202 = vpop.f32.mrf.mxu0
    %v203 = vadd.f32 %v66, %v202
    %204 = vmatmul.f32.gmra.mxu0 %v83
    %v205 = vpop.f32.mrf.mxu0
    %v206 = vadd.f32 %v66, %v205
    %207 = vmatmul.f32.gmra.mxu0 %v86
    %v208 = vpop.f32.mrf.mxu0
    %v209 = vadd.f32 %v66, %v208
    %210 = vmatmul.f32.gmra.mxu0 %v89
    %v211 = vpop.f32.mrf.mxu0
    %v212 = vadd.f32 %v66, %v211
    %213 = vmatmul.f32.gmra.mxu0 %v92
    %v214 = vpop.f32.mrf.mxu0
    %v215 = vadd.f32 %v66, %v214
    %216 = vmatmul.f32.gmra.mxu0 %v95
    %v217 = vpop.f32.mrf.mxu0
    %v218 = vadd.f32 %v66, %v217
    %219 = vdwg.mxu0
    %220 = vmatpush.msra.mxu0 0.0
    %221 = vmatpush.msra.mxu0 0.0
    %222 = vmatpush.msra.mxu0 0.0
    %223 = vmatpush.msra.mxu0 0.0
    %224 = vmatpush.msra.mxu0 0.0
    %225 = vmatpush.msra.mxu0 0.0
    %226 = vmatpush.msra.mxu0 0.0
    %227 = vmatpush.msra.mxu0 0.0
    %228 = vmatpush.msra.mxu0 0.0
    %229 = vmatpush.msra.mxu0 0.0
    %230 = vmatpush.msra.mxu0 0.0
    %231 = vmatpush.msra.mxu0 0.0
    %232 = vmatpush.msra.mxu0 %v61
    %233 = vmatpush.msra.mxu0 %v57
    %234 = vmatpush.msra.mxu0 %v53
    %235 = vmatpush.msra.mxu0 %v49
    %236 = vmatmul.f32.gmra.mxu0 %v74
    %v237 = vpop.f32.mrf.mxu0
    %v238 = vadd.f32 %v67, %v237
    %239 = vmatmul.f32.gmra.mxu0 %v77
    %v240 = vpop.f32.mrf.mxu0
    %v241 = vadd.f32 %v67, %v240
    %242 = vmatmul.f32.gmra.mxu0 %v80
    %v243 = vpop.f32.mrf.mxu0
    %v244 = vadd.f32 %v67, %v243
    %245 = vmatmul.f32.gmra.mxu0 %v83
    %v246 = vpop.f32.mrf.mxu0
    %v247 = vadd.f32 %v67, %v246
    %248 = vmatmul.f32.gmra.mxu0 %v86
    %v249 = vpop.f32.mrf.mxu0
    %v250 = vadd.f32 %v67, %v249
    %251 = vmatmul.f32.gmra.mxu0 %v89
    %v252 = vpop.f32.mrf.mxu0
    %v253 = vadd.f32 %v67, %v252
    %254 = vmatmul.f32.gmra.mxu0 %v92
    %v255 = vpop.f32.mrf.mxu0
    %v256 = vadd.f32 %v67, %v255
    %257 = vmatmul.f32.gmra.mxu0 %v95
    %v258 = vpop.f32.mrf.mxu0
    %v259 = vadd.f32 %v67, %v258
    %260 = vdwg.mxu0
    %v261 = vmax.f32 %v115, 0.0
    %v262 = vmax.f32 %v156, 0.0
    %v263 = vmax.f32 %v197, 0.0
    %v264 = vmax.f32 %v238, 0.0
    %v265 = vmax.f32 %v118, 0.0
    %v266 = vmax.f32 %v159, 0.0
    %v267 = vmax.f32 %v200, 0.0
    %v268 = vmax.f32 %v241, 0.0
    %v269 = vmax.f32 %v121, 0.0
    %v270 = vmax.f32 %v162, 0.0
    %v271 = vmax.f32 %v203, 0.0
    %v272 = vmax.f32 %v244, 0.0
    %v273 = vmax.f32 %v124, 0.0
    %v274 = vmax.f32 %v165, 0.0
    %v275 = vmax.f32 %v206, 0.0
    %v276 = vmax.f32 %v247, 0.0
    %v277 = vmax.f32 %v127, 0.0
    %v278 = vmax.f32 %v168, 0.0
    %v279 = vmax.f32 %v209, 0.0
    %v280 = vmax.f32 %v250, 0.0
    %v281 = vmax.f32 %v130, 0.0
    %v282 = vmax.f32 %v171, 0.0
    %v283 = vmax.f32 %v212, 0.0
    %v284 = vmax.f32 %v253, 0.0
    %v285 = vmax.f32 %v133, 0.0
    %v286 = vmax.f32 %v174, 0.0
    %v287 = vmax.f32 %v215, 0.0
    %v288 = vmax.f32 %v256, 0.0
    %v289 = vmax.f32 %v136, 0.0
    %v290 = vmax.f32 %v177, 0.0
    %v291 = vmax.f32 %v218, 0.0
    %v292 = vmax.f32 %v259, 0.0
    %v293 = vld [vmem:[%s3] sm:$0xf]
    %v295 = vperm.slane %v293, 0
    %v296 = vperm.slane %v293, 1
    %v297 = vperm.slane %v293, 2
    %v298 = vperm.slane %v293, 3
    %v303 = vmul.f32 %v261, %v295
    %v304 = vmul.f32 %v262, %v296
    %v305 = vmul.f32 %v263, %v297
    %v306 = vmul.f32 %v264, %v298
    %v307 = vmul.f32 %v265, %v295
    %v308 = vmul.f32 %v266, %v296
    %v309 = vmul.f32 %v267, %v297
    %v310 = vmul.f32 %v268, %v298
    %v311 = vmul.f32 %v269, %v295
    %v312 = vmul.f32 %v270, %v296
    %v313 = vmul.f32 %v271, %v297
    %v314 = vmul.f32 %v272, %v298
    %v315 = vmul.f32 %v273, %v295
    %v316 = vmul.f32 %v274, %v296
    %v317 = vmul.f32 %v275, %v297
    %v318 = vmul.f32 %v276, %v298
    %v319 = vmul.f32 %v277, %v295
    %v320 = vmul.f32 %v278, %v296
    %v321 = vmul.f32 %v279, %v297
    %v322 = vmul.f32 %v280, %v298
    %v323 = vmul.f32 %v281, %v295
    %v324 = vmul.f32 %v282, %v296
    %v325 = vmul.f32 %v283, %v297
    %v326 = vmul.f32 %v284, %v298
    %v327 = vmul.f32 %v285, %v295
    %v328 = vmul.f32 %v286, %v296
    %v329 = vmul.f32 %v287, %v297
    %v330 = vmul.f32 %v288, %v298
    %v331 = vmul.f32 %v289, %v295
    %v332 = vmul.f32 %v290, %v296
    %v333 = vmul.f32 %v291, %v297
    %v334 = vmul.f32 %v292, %v298
    %v335 = vadd.f32 %v303, %v304
    %v336 = vadd.f32 %v335, %v305
    %v337 = vadd.f32 %v336, %v306
    %338 = vadd.xlane.f32.xlu0 %v337
    %v339 = vpop.xlane.xlu0 %338
    %v340 = vadd.f32 %v307, %v308
    %v341 = vadd.f32 %v340, %v309
    %v342 = vadd.f32 %v341, %v310
    %343 = vadd.xlane.f32.xlu0 %v342
    %v344 = vpop.xlane.xlu0 %343
    %v345 = vadd.f32 %v311, %v312
    %v346 = vadd.f32 %v345, %v313
    %v347 = vadd.f32 %v346, %v314
    %348 = vadd.xlane.f32.xlu0 %v347
    %v349 = vpop.xlane.xlu0 %348
    %v350 = vadd.f32 %v315, %v316
    %v351 = vadd.f32 %v350, %v317
    %v352 = vadd.f32 %v351, %v318
    %353 = vadd.xlane.f32.xlu0 %v352
    %v354 = vpop.xlane.xlu0 %353
    %v355 = vadd.f32 %v319, %v320
    %v356 = vadd.f32 %v355, %v321
    %v357 = vadd.f32 %v356, %v322
    %358 = vadd.xlane.f32.xlu0 %v357
    %v359 = vpop.xlane.xlu0 %358
    %v360 = vadd.f32 %v323, %v324
    %v361 = vadd.f32 %v360, %v325
    %v362 = vadd.f32 %v361, %v326
    %363 = vadd.xlane.f32.xlu0 %v362
    %v364 = vpop.xlane.xlu0 %363
    %v365 = vadd.f32 %v327, %v328
    %v366 = vadd.f32 %v365, %v329
    %v367 = vadd.f32 %v366, %v330
    %368 = vadd.xlane.f32.xlu0 %v367
    %v369 = vpop.xlane.xlu0 %368
    %v370 = vadd.f32 %v331, %v332
    %v371 = vadd.f32 %v370, %v333
    %v372 = vadd.f32 %v371, %v334
    %373 = vadd.xlane.f32.xlu0 %v372
    %v374 = vpop.xlane.xlu0 %373
    %s375 = sld [smem:[#allocation2]]
    %v376 = vstv %s375
    %v377 = vadd.f32 %v339, %v376
    %v378 = vadd.f32 %v344, %v376
    %v379 = vadd.f32 %v349, %v376
    %v380 = vadd.f32 %v354, %v376
    %v381 = vadd.f32 %v359, %v376
    %v382 = vadd.f32 %v364, %v376
    %v383 = vadd.f32 %v369, %v376
    %v384 = vadd.f32 %v374, %v376
    %v393 = vlaneseq
    %v394 = vand.u32 %v393, 127
    %v395 = vperm.slane %v377, %v394
    %v396 = vadd.s32 %v394, 4294967288
    %v397 = vperm.slane %v378, %v396
    %vm398 = vcmask 130112
    %v399 = vsel %vm398, %v397, %v395
    %v400 = vadd.s32 %v394, 4294967280
    %v401 = vperm.slane %v379, %v400
    %vm402 = vcmask 195712
    %v403 = vsel %vm402, %v401, %v399
    %v404 = vadd.s32 %v394, 4294967272
    %v405 = vperm.slane %v380, %v404
    %vm406 = vcmask 261312
    %v407 = vsel %vm406, %v405, %v403
    %v408 = vadd.s32 %v394, 4294967264
    %v409 = vperm.slane %v381, %v408
    %vm410 = vcmask 326912
    %v411 = vsel %vm410, %v409, %v407
    %v412 = vadd.s32 %v394, 4294967256
    %v413 = vperm.slane %v382, %v412
    %vm414 = vcmask 392512
    %v415 = vsel %vm414, %v413, %v411
    %v416 = vadd.s32 %v394, 4294967248
    %v417 = vperm.slane %v383, %v416
    %vm418 = vcmask 458112
    %v419 = vsel %vm418, %v417, %v415
    %v420 = vadd.s32 %v394, 4294967240
    %v421 = vperm.slane %v384, %v420
    %vm422 = vcmask 523712
    %v423 = vsel %vm422, %v421, %v419
    %vm425 = vcmask 516096
    %426 = vst.msk [vmem:[#allocation6] sm:$0x1] %vm425, %v423
    // Predicated region
    $region26: #{tpu_custom_call.1} parent=1 // pred_check
      _
    $region27: #{tpu_custom_call.1} parent=1 // pred_check_branch
      %428 = sbr.rel (0) target = $region29
    $region28: #{tpu_custom_call.1} parent=1 // pred_region
      %430 = vsyncadd [#allocation5], 0
      %s432 = sshll.u32 [#allocation6], 4
      %s433 = int_to_ptr.vmem [resolvable:$true] %s432
      %s434 = sshll.u32 %s5, 4
      %s435 = int_to_ptr.hbm [resolvable:$true] %s434
      %437 = dma.vmem_to_hbm [thread:$0]  %s433, 16, %s435, [#allocation5]
    $region29: #{tpu_custom_call.1} parent=1 // pred_fallthru
      _
    // Predicated region
    $region30: #{tpu_custom_call.1} parent=1 // pred_check
      _
    $region31: #{tpu_custom_call.1} parent=1 // pred_check_branch
      %439 = sbr.rel (0) target = $region33
    $region32: #{tpu_custom_call.1} parent=1 // pred_region
      %441 = dma.done [#allocation5], 16
    $region33: #{tpu_custom_call.1} parent=1 // pred_fallthru
      _
    %442 = vsyncpa [#allocation4], 1
    %443 = vsyncpa [#allocation5], 1

</llo_original>
